<compile_context>
chip_gen: v7x
topology: tpu7x:2x2x1
jax: 0.10.0
libtpu: 0.0.40
codegen_flags: <defaults>
</compile_context>

<pallas_src>
import jax
import jax.numpy as jnp
from jax.experimental import pallas as pl
from jax.experimental.pallas import tpu as pltpu

# ----- module-consistent (small) sizes -----
BATCH = 2
MAX_LEN = 8          # stand-in for max_len = 500
EMBED_SIZE = 32      # stand-in for embed_size = 300
HIDDEN_SIZE = 32     # hidden_size (undefined in module; chosen deterministically)
LABEL_SIZE = 8       # label_size
IN_DIM = MAX_LEN * EMBED_SIZE

# ----- TPU tiling constants -----
B_TILE = 8           # batch rows per tile (pad real training batch to >=128)
K_TILE = 128         # K (feature) tile; use 1024-4096 at real IN_DIM=150000
HIDDEN_PAD = 128     # lane-dense hidden width
LABEL_PAD = 128      # lane-dense label width


def _round_up(x, m):
    return ((x + m - 1) // m) * m


def mlp_loss_kernel(x_ref, w1_ref, b1_ref, w2_ref, b2_ref, g_ref,
                    labels_ref, perex_ref, acc_ref):
    k = pl.program_id(1)

    @pl.when(k == 0)
    def _():
        acc_ref[...] = jnp.zeros_like(acc_ref)

    # Streamed K-tile of Linear1: bf16 operands, f32 MXU accumulation.
    acc_ref[...] += jnp.dot(x_ref[...], w1_ref[...],
                            preferred_element_type=jnp.float32)

    @pl.when(k == pl.num_programs(1) - 1)
    def _():
        # Linear1 epilogue: bias + ReLU.  (Dropout == identity in eval mode.)
        h = jnp.maximum(acc_ref[...] + b1_ref[...], 0.0)

        # Linear2 -> logits.  Padded label columns carry b2 = -1e30, so they
        # vanish under exp() and never win max/argmax.
        logits = jnp.dot(h, w2_ref[...],
                         preferred_element_type=jnp.float32) + b2_ref[...]

        # Row softmax (stable); approx reciprocal runs on the EUP slot.
        m = jnp.max(logits, axis=1, keepdims=True)
        e = jnp.exp(logits - m)
        s = jnp.sum(e, axis=1, keepdims=True)
        labels_ref[...] = (e * pl.reciprocal(s, approx=True)).astype(
            labels_ref.dtype)

        # targets = argmax(glabels, dim=1); first max index == torch.argmax.
        g = g_ref[...]
        bt, lp = g.shape
        lane = jax.lax.broadcasted_iota(jnp.int32, (bt, lp), 1)
        gmax = jnp.max(g, axis=1, keepdims=True)
        idx = jnp.min(jnp.where(g == gmax, lane, lp), axis=1, keepdims=True)
        onehot = (lane == idx).astype(jnp.float32)

        # cross-entropy per example: logsumexp(logits) - logits[target]
        picked = jnp.sum(logits * onehot, axis=1, keepdims=True)   # (bt, 1)
        lse = m + jnp.log(s)                                       # (bt, 1)
        per_example = lse - picked                                 # (bt, 1)
        # Lane-dense store (full (B_TILE,128) slab, no masked partial vst).
        perex_ref[...] = jnp.broadcast_to(per_example, perex_ref.shape)


def mlp_forward(inputs, glabels, w1, b1, w2, b2):
    B = inputs.shape[0]
    # inputs.view(B, -1): contiguous flatten, no data movement (already bf16).
    x = inputs.reshape(B, -1)
    K = x.shape[1]
    n_labels = glabels.shape[1]

    Bp = _round_up(max(B, B_TILE), B_TILE)
    Kp = _round_up(K, K_TILE)

    # One-time padding / packing to lane-dense, tile-aligned layouts.  At real
    # training sizes keep the weights stored in this padded bf16 layout so
    # this is not repeated per step.
    x_p = jnp.zeros((Bp, Kp), jnp.bfloat16).at[:B, :K].set(
        x.astype(jnp.bfloat16))
    w1_p = jnp.zeros((Kp, HIDDEN_PAD), jnp.bfloat16).at[
        :w1.shape[0], :w1.shape[1]].set(w1.astype(jnp.bfloat16))
    b1_p = jnp.zeros((1, HIDDEN_PAD), jnp.float32).at[
        :, :b1.shape[1]].set(b1.astype(jnp.float32))
    w2_p = jnp.zeros((HIDDEN_PAD, LABEL_PAD), jnp.float32).at[
        :w2.shape[0], :w2.shape[1]].set(w2.astype(jnp.float32))
    b2_p = jnp.full((1, LABEL_PAD), -1e30, jnp.float32).at[
        :, :b2.shape[1]].set(b2.astype(jnp.float32))
    g_p = jnp.full((Bp, LABEL_PAD), -1e30, jnp.float32).at[
        :B, :n_labels].set(glabels.astype(jnp.float32))

    grid = (Bp // B_TILE, Kp // K_TILE)   # reduction (K) axis last

    labels_pad, perex = pl.pallas_call(
        mlp_loss_kernel,
        out_shape=(
            jax.ShapeDtypeStruct((Bp, LABEL_PAD), jnp.float32),  # softmax
            jax.ShapeDtypeStruct((Bp, 128), jnp.float32),        # per-ex CE
        ),
        grid=grid,
        in_specs=[
            pl.BlockSpec((B_TILE, K_TILE), lambda i, k: (i, k)),       # x
            pl.BlockSpec((K_TILE, HIDDEN_PAD), lambda i, k: (k, 0)),   # w1
            pl.BlockSpec((1, HIDDEN_PAD), lambda i, k: (0, 0)),        # b1
            pl.BlockSpec((HIDDEN_PAD, LABEL_PAD), lambda i, k: (0, 0)),# w2
            pl.BlockSpec((1, LABEL_PAD), lambda i, k: (0, 0)),         # b2
            pl.BlockSpec((B_TILE, LABEL_PAD), lambda i, k: (i, 0)),    # glabels
        ],
        out_specs=(
            pl.BlockSpec((B_TILE, LABEL_PAD), lambda i, k: (i, 0)),
            pl.BlockSpec((B_TILE, 128), lambda i, k: (i, 0)),
        ),
        scratch_shapes=[pltpu.VMEM((B_TILE, HIDDEN_PAD), jnp.float32)],
        compiler_params=pltpu.CompilerParams(
            dimension_semantics=("parallel", "arbitrary"),
            vmem_limit_bytes=32 * 1024 * 1024,
        ),
    )(x_p, w1_p, b1_p, w2_p, b2_p, g_p)

    labels = labels_pad[:B, :n_labels]
    loss = jnp.mean(perex[:B, 0])
    return loss, labels


def init_params(key):
    k1, k2, k3, k4 = jax.random.split(key, 4)
    # PyTorch nn.Linear default: U(-1/sqrt(fan_in), 1/sqrt(fan_in))
    lim1 = 1.0 / (IN_DIM ** 0.5)
    lim2 = 1.0 / (HIDDEN_SIZE ** 0.5)
    w1 = jax.random.uniform(k1, (IN_DIM, HIDDEN_SIZE), jnp.float32, -lim1, lim1)
    b1 = jax.random.uniform(k2, (1, HIDDEN_SIZE), jnp.float32, -lim1, lim1)
    w2 = jax.random.uniform(k3, (HIDDEN_SIZE, LABEL_SIZE), jnp.float32, -lim2, lim2)
    b2 = jax.random.uniform(k4, (1, LABEL_SIZE), jnp.float32, -lim2, lim2)
    return w1, b1, w2, b2


def reference_forward(inputs, glabels, w1, b1, w2, b2):
    # Pure-JAX reference of what the kernel computes (bf16 x/w1, f32 rest).
    B = inputs.shape[0]
    x = inputs.reshape(B, -1).astype(jnp.bfloat16).astype(jnp.float32)
    w1f = w1.astype(jnp.bfloat16).astype(jnp.float32)
    h = jnp.maximum(x @ w1f + b1, 0.0)
    logits = h @ w2 + b2
    labels = jax.nn.softmax(logits, axis=1)
    tgt = jnp.argmax(glabels, axis=1)
    lse = jax.scipy.special.logsumexp(logits, axis=1)
    loss = jnp.mean(lse - logits[jnp.arange(B), tgt])
    return loss, labels


if __name__ == "__main__":
    key = jax.random.PRNGKey(0)
    kx, kg, kp = jax.random.split(key, 3)

    # Input produced directly in bf16 so the flatten is a free reshape.
    inputs = jax.random.normal(
        kx, (BATCH, MAX_LEN, EMBED_SIZE), jnp.float32).astype(jnp.bfloat16)
    glabels = jax.random.uniform(kg, (BATCH, LABEL_SIZE), jnp.float32)

    w1, b1, w2, b2 = init_params(kp)

    fwd = jax.jit(mlp_forward)
    loss, labels = fwd(inputs, glabels, w1, b1, w2, b2)
    jax.block_until_ready((loss, labels))

    # Sanity: shapes, finiteness, softmax rows sum to 1.
    assert labels.shape == (BATCH, LABEL_SIZE)
    assert bool(jnp.all(jnp.isfinite(labels))) and bool(jnp.isfinite(loss))
    assert jnp.allclose(jnp.sum(labels, axis=1), 1.0, atol=1e-3)

    # Numerical check against a pure-JAX reference.
    ref_loss, ref_labels = reference_forward(inputs, glabels, w1, b1, w2, b2)
    assert jnp.allclose(labels, ref_labels, atol=1e-2, rtol=1e-2)
    assert jnp.allclose(loss, ref_loss, atol=1e-2, rtol=1e-2)

    print("KERNEL_OK")
</pallas_src>

<mosaic_0001>
module attributes {stable_mosaic.version = 11 : i64} {
  func.func @mlp_loss_kernel(%arg0: i32, %arg1: i32, %arg2: memref<8x128xbf16, #tpu.memory_space<vmem>>, %arg3: memref<128x128xbf16, #tpu.memory_space<vmem>>, %arg4: memref<1x128xf32, #tpu.memory_space<vmem>>, %arg5: memref<128x128xf32, #tpu.memory_space<vmem>>, %arg6: memref<1x128xf32, #tpu.memory_space<vmem>>, %arg7: memref<8x128xf32, #tpu.memory_space<vmem>>, %arg8: memref<8x128xf32, #tpu.memory_space<vmem>>, %arg9: memref<8x128xf32, #tpu.memory_space<vmem>>, %arg10: memref<8x128xf32, #tpu.memory_space<vmem>>) attributes {dimension_semantics = [#tpu.dimension_semantics<parallel>, #tpu.dimension_semantics<arbitrary>], iteration_bounds = array<i64: 1, 2>, scalar_prefetch = 0 : i64, scratch_operands = 1 : i64, tpu.core_type = #tpu.core_type<tc>, window_params = [{transform_indices = @transform_0, window_bounds = array<i64: 8, 128>}, {transform_indices = @transform_1, window_bounds = array<i64: 128, 128>}, {pipeline_mode = #tpu.pipeline_mode<synchronous>, transform_indices = @transform_2, window_bounds = array<i64: 1, 128>}, {pipeline_mode = #tpu.pipeline_mode<synchronous>, transform_indices = @transform_3, window_bounds = array<i64: 128, 128>}, {pipeline_mode = #tpu.pipeline_mode<synchronous>, transform_indices = @transform_4, window_bounds = array<i64: 1, 128>}, {transform_indices = @transform_5, window_bounds = array<i64: 8, 128>}, {transform_indices = @transform_6, window_bounds = array<i64: 8, 128>}, {transform_indices = @transform_7, window_bounds = array<i64: 8, 128>}]} {
    %c0_i32 = arith.constant 0 : i32
    %0 = arith.cmpi eq, %arg1, %c0_i32 : i32
    %1 = arith.extui %0 : i1 to i32
    %c0_i32_0 = arith.constant 0 : i32
    %2 = arith.cmpi ne, %1, %c0_i32_0 : i32
    scf.if %2 {
      %cst_9 = arith.constant 0.000000e+00 : f32
      %12 = vector.broadcast %cst_9 : f32 to vector<8x128xf32>
      %c0_10 = arith.constant 0 : index
      %c0_11 = arith.constant 0 : index
      %13 = vector.load %arg10[%c0_10, %c0_11] : memref<8x128xf32, #tpu.memory_space<vmem>>, vector<8x128xf32>
      tpu.vector_store %arg10[%c0_10, %c0_11], %12 {strides = array<i32>} : memref<8x128xf32, #tpu.memory_space<vmem>>, vector<8x128xf32>,
    } else {
    }
    %c0 = arith.constant 0 : index
    %c0_1 = arith.constant 0 : index
    %3 = vector.load %arg10[%c0, %c0_1] : memref<8x128xf32, #tpu.memory_space<vmem>>, vector<8x128xf32>
    %c0_2 = arith.constant 0 : index
    %c0_3 = arith.constant 0 : index
    %4 = vector.load %arg2[%c0_2, %c0_3] : memref<8x128xbf16, #tpu.memory_space<vmem>>, vector<8x128xbf16>
    %c0_4 = arith.constant 0 : index
    %c0_5 = arith.constant 0 : index
    %5 = vector.load %arg3[%c0_4, %c0_5] : memref<128x128xbf16, #tpu.memory_space<vmem>>, vector<128x128xbf16>
    %cst = arith.constant dense<0.000000e+00> : vector<8x128xf32>
    %6 = tpu.matmul %4, %5, %cst {dimension_numbers = #tpu.dot_dimension_numbers<[1], [0], [0], [1], [0, 0, 1, 1], [], []>} : vector<8x128xbf16>, vector<128x128xbf16>, vector<8x128xf32> -> vector<8x128xf32>
    %7 = arith.addf %3, %6 : vector<8x128xf32>
    %c0_6 = arith.constant 0 : index
    %c0_7 = arith.constant 0 : index
    %8 = vector.load %arg10[%c0_6, %c0_7] : memref<8x128xf32, #tpu.memory_space<vmem>>, vector<8x128xf32>
    tpu.vector_store %arg10[%c0_6, %c0_7], %7 {strides = array<i32>} : memref<8x128xf32, #tpu.memory_space<vmem>>, vector<8x128xf32>,
    %c1_i32 = arith.constant 1 : i32
    %9 = arith.cmpi eq, %arg1, %c1_i32 : i32
    %10 = arith.extui %9 : i1 to i32
    %c0_i32_8 = arith.constant 0 : i32
    %11 = arith.cmpi ne, %10, %c0_i32_8 : i32
    scf.if %11 {
      %c0_9 = arith.constant 0 : index
      %c0_10 = arith.constant 0 : index
      %12 = vector.load %arg10[%c0_9, %c0_10] : memref<8x128xf32, #tpu.memory_space<vmem>>, vector<8x128xf32>
      %c0_11 = arith.constant 0 : index
      %c0_12 = arith.constant 0 : index
      %13 = vector.load %arg4[%c0_11, %c0_12] : memref<1x128xf32, #tpu.memory_space<vmem>>, vector<1x128xf32>
      %14 = vector.broadcast %13 : vector<1x128xf32> to vector<8x128xf32>
      %15 = arith.addf %12, %14 : vector<8x128xf32>
      %cst_13 = arith.constant 0.000000e+00 : f32
      %16 = vector.broadcast %cst_13 : f32 to vector<8x128xf32>
      %17 = arith.maximumf %15, %16 : vector<8x128xf32>
      %c0_14 = arith.constant 0 : index
      %c0_15 = arith.constant 0 : index
      %18 = vector.load %arg5[%c0_14, %c0_15] : memref<128x128xf32, #tpu.memory_space<vmem>>, vector<128x128xf32>
      %cst_16 = arith.constant dense<0.000000e+00> : vector<8x128xf32>
      %19 = tpu.matmul %17, %18, %cst_16 {dimension_numbers = #tpu.dot_dimension_numbers<[1], [0], [0], [1], [0, 0, 1, 1], [], []>} : vector<8x128xf32>, vector<128x128xf32>, vector<8x128xf32> -> vector<8x128xf32>
      %c0_17 = arith.constant 0 : index
      %c0_18 = arith.constant 0 : index
      %20 = vector.load %arg6[%c0_17, %c0_18] : memref<1x128xf32, #tpu.memory_space<vmem>>, vector<1x128xf32>
      %21 = vector.broadcast %20 : vector<1x128xf32> to vector<8x128xf32>
      %22 = arith.addf %19, %21 : vector<8x128xf32>
      %cst_19 = arith.constant dense<0xFF800000> : vector<8xf32>
      %23 = vector.multi_reduction <maximumf>, %22, %cst_19 [1] : vector<8x128xf32> to vector<8xf32>
      %24 = vector.shape_cast %23 : vector<8xf32> to vector<8x1xf32>
      %25 = vector.broadcast %24 : vector<8x1xf32> to vector<8x128xf32>
      %26 = arith.subf %22, %25 : vector<8x128xf32>
      %27 = math.exp %26 : vector<8x128xf32>
      %cst_20 = arith.constant dense<0.000000e+00> : vector<8xf32>
      %28 = vector.multi_reduction <add>, %27, %cst_20 [1] : vector<8x128xf32> to vector<8xf32>
      %29 = vector.shape_cast %28 : vector<8xf32> to vector<8x1xf32>
      %30 = tpu.reciprocal %29 {approx = true} : vector<8x1xf32> -> vector<8x1xf32>
      %31 = vector.broadcast %30 : vector<8x1xf32> to vector<8x128xf32>
      %32 = arith.mulf %27, %31 : vector<8x128xf32>
      %c0_21 = arith.constant 0 : index
      %c0_22 = arith.constant 0 : index
      %33 = vector.load %arg8[%c0_21, %c0_22] : memref<8x128xf32, #tpu.memory_space<vmem>>, vector<8x128xf32>
      tpu.vector_store %arg8[%c0_21, %c0_22], %32 {strides = array<i32>} : memref<8x128xf32, #tpu.memory_space<vmem>>, vector<8x128xf32>,
      %c0_23 = arith.constant 0 : index
      %c0_24 = arith.constant 0 : index
      %34 = vector.load %arg7[%c0_23, %c0_24] : memref<8x128xf32, #tpu.memory_space<vmem>>, vector<8x128xf32>
      %35 = tpu.iota {dimensions = array<i32: 1>} : vector<8x128xi32>
      %cst_25 = arith.constant dense<0xFF800000> : vector<8xf32>
      %36 = vector.multi_reduction <maximumf>, %34, %cst_25 [1] : vector<8x128xf32> to vector<8xf32>
      %37 = vector.shape_cast %36 : vector<8xf32> to vector<8x1xf32>
      %38 = vector.broadcast %37 : vector<8x1xf32> to vector<8x128xf32>
      %39 = arith.cmpf oeq, %34, %38 : vector<8x128xf32>
      %c128_i32 = arith.constant 128 : i32
      %40 = vector.broadcast %c128_i32 : i32 to vector<8x128xi32>
      %41 = arith.select %39, %35, %40 : vector<8x128xi1>, vector<8x128xi32>
      %cst_26 = arith.constant dense<2147483647> : vector<8xi32>
      %42 = vector.multi_reduction <minsi>, %41, %cst_26 [1] : vector<8x128xi32> to vector<8xi32>
      %43 = vector.shape_cast %42 : vector<8xi32> to vector<8x1xi32>
      %44 = vector.broadcast %43 : vector<8x1xi32> to vector<8x128xi32>
      %45 = arith.cmpi eq, %35, %44 : vector<8x128xi32>
      %46 = arith.extui %45 : vector<8x128xi1> to vector<8x128xi32>
      %47 = arith.sitofp %46 : vector<8x128xi32> to vector<8x128xf32>
      %48 = arith.mulf %22, %47 : vector<8x128xf32>
      %cst_27 = arith.constant dense<0.000000e+00> : vector<8xf32>
      %49 = vector.multi_reduction <add>, %48, %cst_27 [1] : vector<8x128xf32> to vector<8xf32>
      %50 = vector.shape_cast %49 : vector<8xf32> to vector<8x1xf32>
      %51 = math.log %29 : vector<8x1xf32>
      %52 = arith.addf %24, %51 : vector<8x1xf32>
      %53 = arith.subf %52, %50 : vector<8x1xf32>
      %54 = vector.shape_cast %53 : vector<8x1xf32> to vector<8x1xf32>
      %55 = vector.broadcast %54 : vector<8x1xf32> to vector<8x128xf32>
      %c0_28 = arith.constant 0 : index
      %c0_29 = arith.constant 0 : index
      %56 = vector.load %arg9[%c0_28, %c0_29] : memref<8x128xf32, #tpu.memory_space<vmem>>, vector<8x128xf32>
      tpu.vector_store %arg9[%c0_28, %c0_29], %55 {strides = array<i32>} : memref<8x128xf32, #tpu.memory_space<vmem>>, vector<8x128xf32>,
    } else {
    }
    return
  }
  func.func @transform_0(%arg0: i32, %arg1: i32) -> (i32, i32) {
    %c0_i32 = arith.constant 0 : i32
    return %arg0, %arg1 : i32, i32
  }
  func.func @transform_1(%arg0: i32, %arg1: i32) -> (i32, i32) {
    %c0_i32 = arith.constant 0 : i32
    %c0_i32_0 = arith.constant 0 : i32
    return %arg1, %c0_i32 : i32, i32
  }
  func.func @transform_2(%arg0: i32, %arg1: i32) -> (i32, i32) {
    %c0_i32 = arith.constant 0 : i32
    %c0_i32_0 = arith.constant 0 : i32
    %c0_i32_1 = arith.constant 0 : i32
    return %c0_i32, %c0_i32_0 : i32, i32
  }
  func.func @transform_3(%arg0: i32, %arg1: i32) -> (i32, i32) {
    %c0_i32 = arith.constant 0 : i32
    %c0_i32_0 = arith.constant 0 : i32
    %c0_i32_1 = arith.constant 0 : i32
    return %c0_i32, %c0_i32_0 : i32, i32
  }
  func.func @transform_4(%arg0: i32, %arg1: i32) -> (i32, i32) {
    %c0_i32 = arith.constant 0 : i32
    %c0_i32_0 = arith.constant 0 : i32
    %c0_i32_1 = arith.constant 0 : i32
    return %c0_i32, %c0_i32_0 : i32, i32
  }
  func.func @transform_5(%arg0: i32, %arg1: i32) -> (i32, i32) {
    %c0_i32 = arith.constant 0 : i32
    %c0_i32_0 = arith.constant 0 : i32
    return %arg0, %c0_i32 : i32, i32
  }
  func.func @transform_6(%arg0: i32, %arg1: i32) -> (i32, i32) {
    %c0_i32 = arith.constant 0 : i32
    %c0_i32_0 = arith.constant 0 : i32
    return %arg0, %c0_i32 : i32, i32
  }
  func.func @transform_7(%arg0: i32, %arg1: i32) -> (i32, i32) {
    %c0_i32 = arith.constant 0 : i32
    %c0_i32_0 = arith.constant 0 : i32
    return %arg0, %c0_i32 : i32, i32
  }
}

</mosaic_0001>

<llo_original>
// kernel: mlp_forward.1
$region0: #{mlp_forward.1}
  #allocation0 [shape = 'u32[]', space=smem, size = 0x4, offset = 0x4, fixed_abs, tag = 'smem constant byte address 0x4 - core index']
  #allocation1 [shape = 'u32[144,128]{1,0:T(1,128)}', space=vmem, size = 0x12000, scoped, tag = 'internal scratch']
  #allocation2 [shape = 'f32[8,128]{1,0:T(8,128)}', space=vmem, size = 0x1000, scoped, tag = 'scratch operand']
  %s0 = inlined_call_operand.vmem [shape: bf16[8,256], index: 0, kind: input, shape index: {}]
  %s1 = inlined_call_operand.vmem [shape: bf16[256,128], index: 1, kind: input, shape index: {}]
  %s2 = inlined_call_operand.vmem [shape: f32[1,128], index: 2, kind: input, shape index: {}]
  %s3 = inlined_call_operand.vmem [shape: f32[128,128], index: 3, kind: input, shape index: {}]
  %s4 = inlined_call_operand.vmem [shape: f32[1,128], index: 4, kind: input, shape index: {}]
  %s5 = inlined_call_operand.vmem [shape: f32[8,128], index: 5, kind: input, shape index: {}]
  %s6 = inlined_call_operand.vmem [shape: f32[8,128], index: 6, kind: output, shape index: {0}]
  %s7 = inlined_call_operand.vmem [shape: f32[8,128], index: 7, kind: output, shape index: {1}]
  %8 = xla_tuple %s6, %s7
  %s9 = sld [smem:[#allocation0]]
  $region73: #{mlp_forward.1} parent=0
    _
  %s11 = ssub.s32 1, %s9
  %s12 = scalar_select 0, %s11, %s9
  loop: start=0, step=1, limit=4
  $region2: #{mlp_forward.1} parent=0 // loop_pre_header
    _
  $region3: #{mlp_forward.1} parent=0 // loop_header
    %s14 = sphi 0, %s18
    %p15 = scmp.ge.s32.totalorder %s14, 4
    %s21 = sphi 0, %s33
    %s22 = sphi 0, %s29
    %s23 = sphi 0, %s21
    %s24 = sphi 0, %s22
    %s25 = sphi 0, %s23
    %s26 = sphi 0, %s24
    %s38 = sphi 0, %s40
    %s41 = sphi 0, %s38
    %s42 = sphi 0, %s41
    %s58 = sphi 0, %s42
    %s64 = sphi 0, %s66
    %s67 = sphi 0, %s64
    %s68 = sphi 0, %s67
    %s84 = sphi 0, %s68
    %s88 = sphi 0, %s88
    %s90 = sphi 0, %s88
    %s91 = sphi 0, %s90
    %s105 = sphi 0, %s91
    %s109 = sphi 0, %s109
    %s111 = sphi 0, %s109
    %s112 = sphi 0, %s111
    %s126 = sphi 0, %s112
    %s130 = sphi 0, %s130
    %s132 = sphi 0, %s130
    %s133 = sphi 0, %s132
    %s147 = sphi 0, %s133
    %s153 = sphi 0, %s155
    %s156 = sphi 0, %s153
    %s157 = sphi 0, %s156
    %s173 = sphi 0, %s157
    %s179 = sphi 0, %s181
    %s182 = sphi 0, %s179
    %s183 = sphi 0, %s182
    %s199 = sphi 0, %s183
    %s205 = sphi 0, %s207
    %s208 = sphi 0, %s205
    %s209 = sphi 0, %s208
    %s225 = sphi 0, %s209
  $region4: #{mlp_forward.1} parent=0 // loop_header_branch
    %17 = sbr.rel (%p15) target = $region8
  $region5: #{mlp_forward.1} parent=0 // loop_body
    %s19 = ssub.s32 %s14, 1
    %s20 = ssub.s32 %s14, 2
    %s27 = sadd.s32 1, %s22
    %p28 = scmp.ge.s32.totalorder %s27, 2
    %s29 = scalar_select %p28, 0, %s27
    %s30 = sadd.s32 1, %s21
    %s31 = scalar_select %p28, %s30, %s21
    %p32 = scmp.ge.s32.totalorder %s31, 1
    %s33 = scalar_select %p32, 0, %s31
    %s34 = ssub.s32 %s21, %s33
    %s35 = ssub.s32 %s22, %s29
    %s36 = sor.u32 %s34, %s35
    %p37 = scmp.eq.s32.totalorder %s36, 0
    %s39 = sadd.s32 %s38, 1
    %s40 = scalar_select %p37, %s38, %s39
    %p43 = pneg %p37
    %p44 = scmp.eq.s32.totalorder %s14, 1
    %p45 = por %p43, %p44
    %p46 = scmp.ne.s32.totalorder %s38, %s41
    %p47 = scmp.eq.s32.totalorder %s14, 0
    %p48 = por %p46, %p47
    %p49 = scmp.ne.s32.totalorder %s38, %s41
    %p50 = scmp.eq.s32.totalorder %s19, 1
    %p51 = por %p49, %p50
    %p52 = scmp.ne.s32.totalorder %s41, %s42
    %p53 = scmp.eq.s32.totalorder %s19, 0
    %p54 = por %p52, %p53
    %p55 = scmp.ne.s32.totalorder %s41, %s42
    %p56 = scmp.eq.s32.totalorder %s20, 1
    %p57 = por %p55, %p56
    %p59 = scmp.ne.s32.totalorder %s42, %s58
    %p60 = scmp.eq.s32.totalorder %s20, 0
    %p61 = por %p59, %p60
    %s62 = ssub.s32 %s22, %s29
    %p63 = scmp.eq.s32.totalorder %s62, 0
    %s65 = sadd.s32 %s64, 1
    %s66 = scalar_select %p63, %s64, %s65
    %p69 = pneg %p63
    %p70 = scmp.eq.s32.totalorder %s14, 1
    %p71 = por %p69, %p70
    %p72 = scmp.ne.s32.totalorder %s64, %s67
    %p73 = scmp.eq.s32.totalorder %s14, 0
    %p74 = por %p72, %p73
    %p75 = scmp.ne.s32.totalorder %s64, %s67
    %p76 = scmp.eq.s32.totalorder %s19, 1
    %p77 = por %p75, %p76
    %p78 = scmp.ne.s32.totalorder %s67, %s68
    %p79 = scmp.eq.s32.totalorder %s19, 0
    %p80 = por %p78, %p79
    %p81 = scmp.ne.s32.totalorder %s67, %s68
    %p82 = scmp.eq.s32.totalorder %s20, 1
    %p83 = por %p81, %p82
    %p85 = scmp.ne.s32.totalorder %s68, %s84
    %p86 = scmp.eq.s32.totalorder %s20, 0
    %p87 = por %p85, %p86
    %s89 = sadd.s32 %s88, 1
    %p92 = scmp.eq.s32.totalorder %s14, 1
    %p93 = scmp.ne.s32.totalorder %s88, %s90
    %p94 = scmp.eq.s32.totalorder %s14, 0
    %p95 = por %p93, %p94
    %p96 = scmp.ne.s32.totalorder %s88, %s90
    %p97 = scmp.eq.s32.totalorder %s19, 1
    %p98 = por %p96, %p97
    %p99 = scmp.ne.s32.totalorder %s90, %s91
    %p100 = scmp.eq.s32.totalorder %s19, 0
    %p101 = por %p99, %p100
    %p102 = scmp.ne.s32.totalorder %s90, %s91
    %p103 = scmp.eq.s32.totalorder %s20, 1
    %p104 = por %p102, %p103
    %p106 = scmp.ne.s32.totalorder %s91, %s105
    %p107 = scmp.eq.s32.totalorder %s20, 0
    %p108 = por %p106, %p107
    %s110 = sadd.s32 %s109, 1
    %p113 = scmp.eq.s32.totalorder %s14, 1
    %p114 = scmp.ne.s32.totalorder %s109, %s111
    %p115 = scmp.eq.s32.totalorder %s14, 0
    %p116 = por %p114, %p115
    %p117 = scmp.ne.s32.totalorder %s109, %s111
    %p118 = scmp.eq.s32.totalorder %s19, 1
    %p119 = por %p117, %p118
    %p120 = scmp.ne.s32.totalorder %s111, %s112
    %p121 = scmp.eq.s32.totalorder %s19, 0
    %p122 = por %p120, %p121
    %p123 = scmp.ne.s32.totalorder %s111, %s112
    %p124 = scmp.eq.s32.totalorder %s20, 1
    %p125 = por %p123, %p124
    %p127 = scmp.ne.s32.totalorder %s112, %s126
    %p128 = scmp.eq.s32.totalorder %s20, 0
    %p129 = por %p127, %p128
    %s131 = sadd.s32 %s130, 1
    %p134 = scmp.eq.s32.totalorder %s14, 1
    %p135 = scmp.ne.s32.totalorder %s130, %s132
    %p136 = scmp.eq.s32.totalorder %s14, 0
    %p137 = por %p135, %p136
    %p138 = scmp.ne.s32.totalorder %s130, %s132
    %p139 = scmp.eq.s32.totalorder %s19, 1
    %p140 = por %p138, %p139
    %p141 = scmp.ne.s32.totalorder %s132, %s133
    %p142 = scmp.eq.s32.totalorder %s19, 0
    %p143 = por %p141, %p142
    %p144 = scmp.ne.s32.totalorder %s132, %s133
    %p145 = scmp.eq.s32.totalorder %s20, 1
    %p146 = por %p144, %p145
    %p148 = scmp.ne.s32.totalorder %s133, %s147
    %p149 = scmp.eq.s32.totalorder %s20, 0
    %p150 = por %p148, %p149
    %s151 = ssub.s32 %s21, %s33
    %p152 = scmp.eq.s32.totalorder %s151, 0
    %s154 = sadd.s32 %s153, 1
    %s155 = scalar_select %p152, %s153, %s154
    %p158 = pneg %p152
    %p159 = scmp.eq.s32.totalorder %s14, 1
    %p160 = por %p158, %p159
    %p161 = scmp.ne.s32.totalorder %s153, %s156
    %p162 = scmp.eq.s32.totalorder %s14, 0
    %p163 = por %p161, %p162
    %p164 = scmp.ne.s32.totalorder %s153, %s156
    %p165 = scmp.eq.s32.totalorder %s19, 1
    %p166 = por %p164, %p165
    %p167 = scmp.ne.s32.totalorder %s156, %s157
    %p168 = scmp.eq.s32.totalorder %s19, 0
    %p169 = por %p167, %p168
    %p170 = scmp.ne.s32.totalorder %s156, %s157
    %p171 = scmp.eq.s32.totalorder %s20, 1
    %p172 = por %p170, %p171
    %p174 = scmp.ne.s32.totalorder %s157, %s173
    %p175 = scmp.eq.s32.totalorder %s20, 0
    %p176 = por %p174, %p175
    %s177 = ssub.s32 %s21, %s33
    %p178 = scmp.eq.s32.totalorder %s177, 0
    %s180 = sadd.s32 %s179, 1
    %s181 = scalar_select %p178, %s179, %s180
    %p184 = pneg %p178
    %p185 = scmp.eq.s32.totalorder %s14, 1
    %p186 = por %p184, %p185
    %p187 = scmp.ne.s32.totalorder %s179, %s182
    %p188 = scmp.eq.s32.totalorder %s14, 0
    %p189 = por %p187, %p188
    %p190 = scmp.ne.s32.totalorder %s179, %s182
    %p191 = scmp.eq.s32.totalorder %s19, 1
    %p192 = por %p190, %p191
    %p193 = scmp.ne.s32.totalorder %s182, %s183
    %p194 = scmp.eq.s32.totalorder %s19, 0
    %p195 = por %p193, %p194
    %p196 = scmp.ne.s32.totalorder %s182, %s183
    %p197 = scmp.eq.s32.totalorder %s20, 1
    %p198 = por %p196, %p197
    %p200 = scmp.ne.s32.totalorder %s183, %s199
    %p201 = scmp.eq.s32.totalorder %s20, 0
    %p202 = por %p200, %p201
    %s203 = ssub.s32 %s21, %s33
    %p204 = scmp.eq.s32.totalorder %s203, 0
    %s206 = sadd.s32 %s205, 1
    %s207 = scalar_select %p204, %s205, %s206
    %p210 = pneg %p204
    %p211 = scmp.eq.s32.totalorder %s14, 1
    %p212 = por %p210, %p211
    %p213 = scmp.ne.s32.totalorder %s205, %s208
    %p214 = scmp.eq.s32.totalorder %s14, 0
    %p215 = por %p213, %p214
    %p216 = scmp.ne.s32.totalorder %s205, %s208
    %p217 = scmp.eq.s32.totalorder %s19, 1
    %p218 = por %p216, %p217
    %p219 = scmp.ne.s32.totalorder %s208, %s209
    %p220 = scmp.eq.s32.totalorder %s19, 0
    %p221 = por %p219, %p220
    %p222 = scmp.ne.s32.totalorder %s208, %s209
    %p223 = scmp.eq.s32.totalorder %s20, 1
    %p224 = por %p222, %p223
    %p226 = scmp.ne.s32.totalorder %s209, %s225
    %p227 = scmp.eq.s32.totalorder %s20, 0
    %p228 = por %p226, %p227
    %p229 = scmp.le.s32.totalorder 1, %s14
    %p230 = scmp.lt.s32.totalorder %s14, 3
    %p231 = pnand %p229, %p230
    %p232 = pneg %p231
    // Predicated region
    $region9: #{mlp_forward.1} parent=5 // pred_check
      _
    $region10: #{mlp_forward.1} parent=5 // pred_check_branch
      %234 = sbr.rel (%p231) target = $region12
    $region11: #{mlp_forward.1} parent=5 // pred_region
      %s235 = ssub.s32 %s14, 1
      // Predicated region
      $region13: #{mlp_forward.1} parent=11 // pred_check
        %p236 = pneg %p101
      $region14: #{mlp_forward.1} parent=11 // pred_check_branch
        %238 = sbr.rel (%p236) target = $region16
      $region15: #{mlp_forward.1} parent=11 // pred_region
        _
      $region16: #{mlp_forward.1} parent=11 // pred_fallthru
        _
      // Predicated region
      $region17: #{mlp_forward.1} parent=11 // pred_check
        %p239 = pneg %p122
      $region18: #{mlp_forward.1} parent=11 // pred_check_branch
        %241 = sbr.rel (%p239) target = $region20
      $region19: #{mlp_forward.1} parent=11 // pred_region
        _
      $region20: #{mlp_forward.1} parent=11 // pred_fallthru
        _
      // Predicated region
      $region21: #{mlp_forward.1} parent=11 // pred_check
        %p242 = pneg %p143
      $region22: #{mlp_forward.1} parent=11 // pred_check_branch
        %244 = sbr.rel (%p242) target = $region24
      $region23: #{mlp_forward.1} parent=11 // pred_region
        _
      $region24: #{mlp_forward.1} parent=11 // pred_fallthru
        _
      // Predicated region
      $region25: #{mlp_forward.1} parent=11 // pred_check
        %p245 = pneg %p169
      $region26: #{mlp_forward.1} parent=11 // pred_check_branch
        %247 = sbr.rel (%p245) target = $region28
      $region27: #{mlp_forward.1} parent=11 // pred_region
        %p248 = scmp.lt.s32.totalorder %s23, 0
        %s249 = scalar_select %p248, %s23, 0
        %s250 = smul.addr %s249, 8
        %s251 = scalar_lea.vmem %s5, %s250
      $region28: #{mlp_forward.1} parent=11 // pred_fallthru
        _
    $region12: #{mlp_forward.1} parent=5 // pred_fallthru
      _
    %p252 = scmp.lt.s32.totalorder %s14, 2
    // Predicated region
    $region29: #{mlp_forward.1} parent=5 // pred_check
      %p253 = pneg %p252
    $region30: #{mlp_forward.1} parent=5 // pred_check_branch
      %255 = sbr.rel (%p253) target = $region32
    $region31: #{mlp_forward.1} parent=5 // pred_region
      // Predicated region
      $region33: #{mlp_forward.1} parent=31 // pred_check
        %p256 = pneg %p48
      $region34: #{mlp_forward.1} parent=31 // pred_check_branch
        %258 = sbr.rel (%p256) target = $region36
      $region35: #{mlp_forward.1} parent=31 // pred_region
        %p259 = scmp.lt.s32.totalorder %s21, 0
        %s260 = scalar_select %p259, %s21, 0
        %p261 = scmp.lt.s32.totalorder %s22, 1
        %s262 = scalar_select %p261, %s22, 1
        %s263 = smul.addr %s260, 2
        %s264 = sadd.s32 %s262, %s263
        %s265 = smul.addr %s264, 4
        %s266 = scalar_lea.vmem %s0, %s265
      $region36: #{mlp_forward.1} parent=31 // pred_fallthru
        _
      // Predicated region
      $region37: #{mlp_forward.1} parent=31 // pred_check
        %p267 = pneg %p74
      $region38: #{mlp_forward.1} parent=31 // pred_check_branch
        %269 = sbr.rel (%p267) target = $region40
      $region39: #{mlp_forward.1} parent=31 // pred_region
        %s270 = smul.u32 16, %s22
        %p271 = scmp.lt.s32.totalorder %s270, 31
        %s272 = scalar_select %p271, %s270, 31
        %s273 = smul.addr %s272, 4
        %s274 = scalar_lea.vmem %s1, %s273
        %s275 = smul.u32 16, %s22
      $region40: #{mlp_forward.1} parent=31 // pred_fallthru
        _
    $region32: #{mlp_forward.1} parent=5 // pred_fallthru
      _
    %p276 = scmp.le.s32.totalorder 1, %s14
    %p277 = scmp.lt.s32.totalorder %s14, 3
    %p278 = pnand %p276, %p277
    %p279 = pneg %p278
    // Predicated region
    $region41: #{mlp_forward.1} parent=5 // pred_check
      _
    $region42: #{mlp_forward.1} parent=5 // pred_check_branch
      %281 = sbr.rel (%p278) target = $region44
    $region43: #{mlp_forward.1} parent=5 // pred_region
      %s282 = ssub.s32 %s14, 1
      %p283 = scmp.lt.s32.totalorder %s23, 0
      %s284 = scalar_select %p283, %s23, 0
      %p285 = scmp.lt.s32.totalorder %s24, 1
      %s286 = scalar_select %p285, %s24, 1
      %s287 = smul.addr %s284, 2
      %s288 = sadd.s32 %s286, %s287
      %s289 = smul.addr %s288, 4
      %s290 = scalar_lea.vmem %s0, %s289
      %p291 = pneg %p54
      %p292 = pneg %p51
      %s293 = smul.u32 16, %s24
      %p294 = scmp.lt.s32.totalorder %s293, 31
      %s295 = scalar_select %p294, %s293, 31
      %s296 = smul.addr %s295, 4
      %s297 = scalar_lea.vmem %s1, %s296
      %p298 = pneg %p80
      %p299 = pneg %p77
      %p300 = pneg %p101
      %p301 = pneg %p98
      %p302 = pneg %p122
      %p303 = pneg %p119
      %p304 = pneg %p143
      %p305 = pneg %p140
      %p306 = scmp.lt.s32.totalorder %s23, 0
      %s307 = scalar_select %p306, %s23, 0
      %s308 = smul.addr %s307, 8
      %s309 = scalar_lea.vmem %s5, %s308
      %p310 = pneg %p169
      %p311 = pneg %p166
      %p312 = pneg %p195
      %p313 = pneg %p192
      %p314 = scmp.lt.s32.totalorder %s23, 0
      %s315 = scalar_select %p314, %s23, 0
      %s316 = smul.addr %s315, 8
      %s317 = scalar_lea.vmem %s6, %s316
      %p318 = pneg %p221
      %p319 = pneg %p218
      %p320 = scmp.lt.s32.totalorder %s23, 0
      %s321 = scalar_select %p320, %s23, 0
      %s322 = smul.addr %s321, 8
      %s323 = scalar_lea.vmem %s7, %s322
      %p324 = scmp.lt.s32.totalorder %s23, 0
      %s325 = scalar_select %p324, %s23, 0
      %p326 = scmp.lt.s32.totalorder %s24, 1
      %s327 = scalar_select %p326, %s24, 1
      %s328 = smul.addr %s325, 2
      %s329 = sadd.s32 %s327, %s328
      %s330 = smul.addr %s329, 4
      %s331 = scalar_lea.vmem %s0, %s330
      %s332 = smul.u32 16, %s24
      %p333 = scmp.lt.s32.totalorder %s332, 31
      %s334 = scalar_select %p333, %s332, 31
      %s335 = smul.addr %s334, 4
      %s336 = scalar_lea.vmem %s1, %s335
      %s337 = smul.u32 16, %s24
      %p338 = scmp.lt.s32.totalorder %s23, 0
      %s339 = scalar_select %p338, %s23, 0
      %s340 = smul.addr %s339, 8
      %s341 = scalar_lea.vmem %s5, %s340
      %p342 = scmp.lt.s32.totalorder %s23, 0
      %s343 = scalar_select %p342, %s23, 0
      %s344 = smul.addr %s343, 8
      %s345 = scalar_lea.vmem %s6, %s344
      %p346 = scmp.lt.s32.totalorder %s23, 0
      %s347 = scalar_select %p346, %s23, 0
      %s348 = smul.addr %s347, 8
      %s349 = scalar_lea.vmem %s7, %s348
      %p351 = scmp.eq.s32.totalorder %s24, 0
      // Predicated region
      $region45: #{mlp_forward.1} parent=43 // pred_check
        %p352 = pneg %p351
      $region46: #{mlp_forward.1} parent=43 // pred_check_branch
        %354 = sbr.rel (%p352) target = $region48
      $region47: #{mlp_forward.1} parent=43 // pred_region
        %355 = vst [vmem:[#allocation2] sm:$0xff] 0.0
      $region48: #{mlp_forward.1} parent=43 // pred_fallthru
        _
      %v356 = vld [vmem:[#allocation2] sm:$0xff]
      %v357 = vld [vmem:[%s331] sm:$0xf]
      %v358 = vld [vmem:[%s336] sm:$0xf]
      %v359 = vld [vmem:[%s336 + $0x4] sm:$0xf]
      %v360 = vld [vmem:[%s336 + $0x8] sm:$0xf]
      %v361 = vld [vmem:[%s336 + $0xc] sm:$0xf]
      %v362 = vld [vmem:[%s336 + $0x10] sm:$0xf]
      %v363 = vld [vmem:[%s336 + $0x14] sm:$0xf]
      %v364 = vld [vmem:[%s336 + $0x18] sm:$0xf]
      %v365 = vld [vmem:[%s336 + $0x1c] sm:$0xf]
      %v366 = vld [vmem:[%s336 + $0x20] sm:$0xf]
      %v367 = vld [vmem:[%s336 + $0x24] sm:$0xf]
      %v368 = vld [vmem:[%s336 + $0x28] sm:$0xf]
      %v369 = vld [vmem:[%s336 + $0x2c] sm:$0xf]
      %v370 = vld [vmem:[%s336 + $0x30] sm:$0xf]
      %v371 = vld [vmem:[%s336 + $0x34] sm:$0xf]
      %v372 = vld [vmem:[%s336 + $0x38] sm:$0xf]
      %v373 = vld [vmem:[%s336 + $0x3c] sm:$0xf]
      %v390 = vunpack.c.l.b16 %v358
      %v391 = vunpack.c.l.b16 %v359
      %v392 = vunpack.c.l.b16 %v360
      %v393 = vunpack.c.l.b16 %v361
      %v394 = vunpack.c.l.b16 %v362
      %v395 = vunpack.c.l.b16 %v363
      %v396 = vunpack.c.l.b16 %v364
      %v397 = vunpack.c.l.b16 %v365
      %v398 = vunpack.c.l.b16 %v366
      %v399 = vunpack.c.l.b16 %v367
      %v400 = vunpack.c.l.b16 %v368
      %v401 = vunpack.c.l.b16 %v369
      %v402 = vunpack.c.l.b16 %v370
      %v403 = vunpack.c.l.b16 %v371
      %v404 = vunpack.c.l.b16 %v372
      %v405 = vunpack.c.l.b16 %v373
      %v406 = vpack.c.b16 %v391, %v390
      %v407 = vpack.c.b16 %v393, %v392
      %v408 = vpack.c.b16 %v395, %v394
      %v409 = vpack.c.b16 %v397, %v396
      %v410 = vpack.c.b16 %v399, %v398
      %v411 = vpack.c.b16 %v401, %v400
      %v412 = vpack.c.b16 %v403, %v402
      %v413 = vpack.c.b16 %v405, %v404
      %422 = vmatprep.subr.bf16.mxu0 0
      %423 = vmatpush1.bf16.msra.mxu0 %v406
      %424 = vmatprep.subr.bf16.mxu0 0
      %425 = vmatpush1.bf16.msra.mxu0 %v407
      %426 = vmatprep.subr.bf16.mxu0 0
      %427 = vmatpush1.bf16.msra.mxu0 %v408
      %428 = vmatprep.subr.bf16.mxu0 0
      %429 = vmatpush1.bf16.msra.mxu0 %v409
      %430 = vmatprep.subr.bf16.mxu0 0
      %431 = vmatpush1.bf16.msra.mxu0 %v410
      %432 = vmatprep.subr.bf16.mxu0 0
      %433 = vmatpush1.bf16.msra.mxu0 %v411
      %434 = vmatprep.subr.bf16.mxu0 0
      %435 = vmatpush1.bf16.msra.mxu0 %v412
      %436 = vmatprep.subr.bf16.mxu0 0
      %437 = vmatpush1.bf16.msra.mxu0 %v413
      %438 = vmatprep.subr.bf16.mxu0 0
      %439 = vmatpush1.bf16.msra.mxu0 0
      %440 = vmatprep.subr.bf16.mxu0 0
      %441 = vmatpush1.bf16.msra.mxu0 0
      %442 = vmatprep.subr.bf16.mxu0 0
      %443 = vmatpush1.bf16.msra.mxu0 0
      %444 = vmatprep.subr.bf16.mxu0 0
      %445 = vmatpush1.bf16.msra.mxu0 0
      %446 = vmatprep.subr.bf16.mxu0 0
      %447 = vmatpush1.bf16.msra.mxu0 0
      %448 = vmatprep.subr.bf16.mxu0 0
      %449 = vmatpush1.bf16.msra.mxu0 0
      %450 = vmatprep.subr.bf16.mxu0 0
      %451 = vmatpush1.bf16.msra.mxu0 0
      %452 = vmatprep.subr.bf16.mxu0 0
      %453 = vmatpush1.bf16.msra.mxu0 0
      %454 = vmatprep.mubr.bf16.mxu0 0
      %455 = vmatmul.mubr.bf16.gmra.mrb[0].mxu0 %v357
      %v456 = vpop.f32.mrb[0].mxu0
      %v457 = vadd.f32 0.0, %v456
      %v458 = vpop.f32.mrb[0].mxu0
      %v459 = vpop.f32.mrb[0].mxu0
      %v460 = vpop.f32.mrb[0].mxu0
      %461 = vdwg.mxu0
      %v462 = vadd.f32 %v356, %v457
      %463 = vst [vmem:[#allocation2] sm:$0xff] %v462
      %p464 = scmp.eq.s32.totalorder %s24, 1
      // Predicated region
      $region49: #{mlp_forward.1} parent=43 // pred_check
        %p465 = pneg %p464
      $region50: #{mlp_forward.1} parent=43 // pred_check_branch
        %467 = sbr.rel (%p465) target = $region52
      $region51: #{mlp_forward.1} parent=43 // pred_region
        %v468 = vld [vmem:[#allocation2] sm:$0xff]
        %v469 = vld [vmem:[%s2] sm:$0x1]
        %v471 = vlaneseq
        %v472 = vshrl.u32 %v471, 7
        %v473 = vsub.s32 0, %v472
        %v474 = vrot.slane %v469, %v473
        %v476 = vadd.f32 %v468, %v474
        %v477 = vmax.f32 %v476, 0.0
        %v478 = vld [vmem:[%s3] sm:$0xff]
        %v479 = vld [vmem:[%s3 + $0x8] sm:$0xff]
        %v480 = vld [vmem:[%s3 + $0x10] sm:$0xff]
        %v481 = vld [vmem:[%s3 + $0x18] sm:$0xff]
        %v482 = vld [vmem:[%s3 + $0x20] sm:$0xff]
        %v483 = vld [vmem:[%s3 + $0x28] sm:$0xff]
        %v484 = vld [vmem:[%s3 + $0x30] sm:$0xff]
        %v485 = vld [vmem:[%s3 + $0x38] sm:$0xff]
        %v486 = vld [vmem:[%s3 + $0x40] sm:$0xff]
        %v487 = vld [vmem:[%s3 + $0x48] sm:$0xff]
        %v488 = vld [vmem:[%s3 + $0x50] sm:$0xff]
        %v489 = vld [vmem:[%s3 + $0x58] sm:$0xff]
        %v490 = vld [vmem:[%s3 + $0x60] sm:$0xff]
        %v491 = vld [vmem:[%s3 + $0x68] sm:$0xff]
        %v492 = vld [vmem:[%s3 + $0x70] sm:$0xff]
        %v493 = vld [vmem:[%s3 + $0x78] sm:$0xff]
        %v494 = vld [vmem:[%s4] sm:$0x1]
        %v496 = vlaneseq
        %v497 = vshrl.u32 %v496, 7
        %v498 = vsub.s32 0, %v497
        %v499 = vrot.slane %v494, %v498
        %501 = vmatprep.subr.mxu0 0.0
        %502 = vmatpush1.msra.mxu0 %v478
        %503 = vmatprep.subr.mxu0 0.0
        %504 = vmatpush1.msra.mxu0 %v479
        %505 = vmatprep.subr.mxu0 0.0
        %506 = vmatpush1.msra.mxu0 %v480
        %507 = vmatprep.subr.mxu0 0.0
        %508 = vmatpush1.msra.mxu0 %v481
        %509 = vmatprep.subr.mxu0 0.0
        %510 = vmatpush1.msra.mxu0 %v482
        %511 = vmatprep.subr.mxu0 0.0
        %512 = vmatpush1.msra.mxu0 %v483
        %513 = vmatprep.subr.mxu0 0.0
        %514 = vmatpush1.msra.mxu0 %v484
        %515 = vmatprep.subr.mxu0 0.0
        %516 = vmatpush1.msra.mxu0 %v485
        %517 = vmatprep.subr.mxu0 0.0
        %518 = vmatpush1.msra.mxu0 %v486
        %519 = vmatprep.subr.mxu0 0.0
        %520 = vmatpush1.msra.mxu0 %v487
        %521 = vmatprep.subr.mxu0 0.0
        %522 = vmatpush1.msra.mxu0 %v488
        %523 = vmatprep.subr.mxu0 0.0
        %524 = vmatpush1.msra.mxu0 %v489
        %525 = vmatprep.subr.mxu0 0.0
        %526 = vmatpush1.msra.mxu0 %v490
        %527 = vmatprep.subr.mxu0 0.0
        %528 = vmatpush1.msra.mxu0 %v491
        %529 = vmatprep.subr.mxu0 0.0
        %530 = vmatpush1.msra.mxu0 %v492
        %531 = vmatprep.subr.mxu0 0.0
        %532 = vmatpush1.msra.mxu0 %v493
        %533 = vmatprep.subr.mxu0 0.0
        %534 = vmatpush1.msra.mxu0 0.0
        %535 = vmatprep.subr.mxu0 0.0
        %536 = vmatpush1.msra.mxu0 0.0
        %537 = vmatprep.subr.mxu0 0.0
        %538 = vmatpush1.msra.mxu0 0.0
        %539 = vmatprep.subr.mxu0 0.0
        %540 = vmatpush1.msra.mxu0 0.0
        %541 = vmatprep.subr.mxu0 0.0
        %542 = vmatpush1.msra.mxu0 0.0
        %543 = vmatprep.subr.mxu0 0.0
        %544 = vmatpush1.msra.mxu0 0.0
        %545 = vmatprep.subr.mxu0 0.0
        %546 = vmatpush1.msra.mxu0 0.0
        %547 = vmatprep.subr.mxu0 0.0
        %548 = vmatpush1.msra.mxu0 0.0
        %549 = vmatprep.subr.mxu0 0.0
        %550 = vmatpush1.msra.mxu0 0.0
        %551 = vmatprep.subr.mxu0 0.0
        %552 = vmatpush1.msra.mxu0 0.0
        %553 = vmatprep.subr.mxu0 0.0
        %554 = vmatpush1.msra.mxu0 0.0
        %555 = vmatprep.subr.mxu0 0.0
        %556 = vmatpush1.msra.mxu0 0.0
        %557 = vmatprep.subr.mxu0 0.0
        %558 = vmatpush1.msra.mxu0 0.0
        %559 = vmatprep.subr.mxu0 0.0
        %560 = vmatpush1.msra.mxu0 0.0
        %561 = vmatprep.subr.mxu0 0.0
        %562 = vmatpush1.msra.mxu0 0.0
        %563 = vmatprep.subr.mxu0 0.0
        %564 = vmatpush1.msra.mxu0 0.0
        %565 = vmatprep.mubr.f32.mxu0 0.0
        %566 = vmatmul.mubr.f32.gmra.mrb[0].mxu0 %v477
        %v567 = vpop.f32.mrb[0].mxu0
        %v568 = vadd.f32 %v499, %v567
        %v569 = vpop.f32.mrb[0].mxu0
        %570 = vdwg.mxu0
        %571 = vmax.xlane.f32.xlu0 %v568
        %v572 = vpop.xlane.xlu0 %571
        %v573 = vsub.f32 %v568, %v572
        %v574 = vmul.f32 %v573, 1.442695
        %v575 = vpow.pop %v574
        %576 = vadd.xlane.f32.xlu0 %v575
        %v577 = vpop.xlane.xlu0 %576
        %v578 = vrcp.pop %v577
        %v579 = vmul.f32 %v575, %v578
        %580 = vst [vmem:[%s345] sm:$0xff] %v579
        %v581 = vld [vmem:[%s341] sm:$0xff]
        %v582 = vlaneseq
        %v583 = vand.u32 %v582, 127
        %584 = vmax.xlane.f32.xlu0 %v581
        %v585 = vpop.xlane.xlu0 %584
        %vm586 = vcmp.eq.f32.partialorder %v581, %v585
        %v587 = vsel %vm586, %v583, 128
        %v588 = vand.u32 %v587, 65535
        %v589 = vshra.s32 %v587, 16
        %v590 = vcvt.s32.f32 %v588
        %v591 = vcvt.s32.f32 %v589
        %592 = vmin.xlane.f32.xlu0 %v591
        %v593 = vpop.xlane.xlu0 %592
        %vm594 = vcmp.eq.f32.partialorder %v591, %v593
        %v595 = vsel %vm594, %v590, inf
        %596 = vmin.xlane.f32.xlu0 %v595
        %v597 = vpop.xlane.xlu0 %596
        %v598 = vcvt.f32.s32 %v597
        %v599 = vcvt.f32.s32 %v593
        %v600 = vshll.u32 %v599, 16
        %v601 = vadd.s32 %v600, %v598
        %vm602 = vcmp.eq.s32.totalorder %v583, %v601
        %v603 = vsel %vm602, 1, 0
        %v604 = vcvt.s32.f32 %v603
        %v605 = vmul.f32 %v568, %v604
        %606 = vadd.xlane.f32.xlu0 %v605
        %v607 = vpop.xlane.xlu0 %606
        %v608 = vlog2.pop %v577
        %v609 = vmul.f32 %v608, 0.6931472
        %v610 = vadd.f32 %v572, %v609
        %v611 = vsub.f32 %v610, %v607
        %612 = vst [vmem:[%s349] sm:$0xff] %v611
      $region52: #{mlp_forward.1} parent=43 // pred_fallthru
        _
      %p613 = scmp.lt.s32.totalorder %s23, 0
      %s614 = scalar_select %p613, %s23, 0
      %s615 = smul.addr %s614, 8
      %s616 = scalar_lea.vmem %s6, %s615
      %p617 = scmp.lt.s32.totalorder %s23, 0
      %s618 = scalar_select %p617, %s23, 0
      %s619 = smul.addr %s618, 8
      %s620 = scalar_lea.vmem %s7, %s619
      // Predicated region
      $region53: #{mlp_forward.1} parent=43 // pred_check
        %p621 = pneg %p192
      $region54: #{mlp_forward.1} parent=43 // pred_check_branch
        %623 = sbr.rel (%p621) target = $region56
      $region55: #{mlp_forward.1} parent=43 // pred_region
        _
      $region56: #{mlp_forward.1} parent=43 // pred_fallthru
        _
      // Predicated region
      $region57: #{mlp_forward.1} parent=43 // pred_check
        %p624 = pneg %p218
      $region58: #{mlp_forward.1} parent=43 // pred_check_branch
        %626 = sbr.rel (%p624) target = $region60
      $region59: #{mlp_forward.1} parent=43 // pred_region
        _
      $region60: #{mlp_forward.1} parent=43 // pred_fallthru
        _
      // Predicated region
      $region61: #{mlp_forward.1} parent=43 // pred_check
        %p627 = pneg %p192
      $region62: #{mlp_forward.1} parent=43 // pred_check_branch
        %629 = sbr.rel (%p627) target = $region64
      $region63: #{mlp_forward.1} parent=43 // pred_region
        %p630 = scmp.lt.s32.totalorder %s23, 0
        %s631 = scalar_select %p630, %s23, 0
        %s632 = smul.addr %s631, 8
        %s633 = scalar_lea.vmem %s6, %s632
      $region64: #{mlp_forward.1} parent=43 // pred_fallthru
        _
      // Predicated region
      $region65: #{mlp_forward.1} parent=43 // pred_check
        %p634 = pneg %p218
      $region66: #{mlp_forward.1} parent=43 // pred_check_branch
        %636 = sbr.rel (%p634) target = $region68
      $region67: #{mlp_forward.1} parent=43 // pred_region
        %p637 = scmp.lt.s32.totalorder %s23, 0
        %s638 = scalar_select %p637, %s23, 0
        %s639 = smul.addr %s638, 8
        %s640 = scalar_lea.vmem %s7, %s639
      $region68: #{mlp_forward.1} parent=43 // pred_fallthru
        _
    $region44: #{mlp_forward.1} parent=5 // pred_fallthru
      _
    %p641 = scmp.le.s32.totalorder 2, %s14
    // Predicated region
    $region69: #{mlp_forward.1} parent=5 // pred_check
      %p642 = pneg %p641
    $region70: #{mlp_forward.1} parent=5 // pred_check_branch
      %644 = sbr.rel (%p642) target = $region72
    $region71: #{mlp_forward.1} parent=5 // pred_region
      %s645 = ssub.s32 %s14, 2
    $region72: #{mlp_forward.1} parent=5 // pred_fallthru
      _
  $region6: #{mlp_forward.1} parent=0 // loop_footer
    %s18 = sadd.s32 1, %s14
  $region7: #{mlp_forward.1} parent=0 // loop_footer_branch
    %13 = sbr.rel target = $region3
  $region8: #{mlp_forward.1} parent=0 // loop_exit
    _

</llo_original>
